<compile_context>
chip_gen: v5e
topology: v5e:2x2
jax: 0.10.0
libtpu: 0.0.40
codegen_flags: <defaults>
</compile_context>

<pallas_src>
import functools

import jax
import jax.numpy as jnp
from jax.experimental import pallas as pl
from jax.experimental.pallas import tpu as pltpu


# -----------------------------------------------------------------------------
# Kernels
# -----------------------------------------------------------------------------
def _patchify_k192_kernel(x_ref, w_ref, o_ref, *, rows, p, pc, compute_dtype):
    """Fused patch gather + single wide-K matmul.

    x_ref: (T, p, nW, pC)   one contiguous HBM slab (T image row-strips)
    w_ref: (p*pC, D)        full flattened conv weight, resident in VMEM
    o_ref: (T*nW, D)        one output row per patch
    """
    # Build the im2col LHS in VMEM: lane-concat the p per-kh patch rows.
    # (The (T, nW, pC) -> (T*nW, pC) collapse is layout-free because nW % 8 == 0.)
    pieces = [x_ref[:, kh].reshape(rows, pc) for kh in range(p)]
    a = jnp.concatenate(pieces, axis=-1)                      # (rows, p*pC)
    if compute_dtype is not None:
        a = a.astype(compute_dtype)                           # in-kernel cast only
    o_ref[...] = jnp.dot(
        a, w_ref[...], preferred_element_type=jnp.float32
    ).astype(o_ref.dtype)


def _patchify_kloop_kernel(x_ref, w_ref, o_ref, *, rows, p, pc, compute_dtype):
    """Safety-net variant: unrolled loop of K=pC matmuls, f32 accumulation.

    Same DMA structure as the fused kernel (one contiguous slab per block);
    only the MXU restructure differs.  Used if the lane-concat path fails.
    """
    acc = None
    for kh in range(p):
        a = x_ref[:, kh].reshape(rows, pc)
        if compute_dtype is not None:
            a = a.astype(compute_dtype)
        t = jnp.dot(a, w_ref[kh], preferred_element_type=jnp.float32)
        acc = t if acc is None else acc + t
    o_ref[...] = acc.astype(o_ref.dtype)


def _matmul_kernel(p_ref, w_ref, o_ref, *, compute_dtype):
    """Fallback path kernel: plain tiled matmul on pre-extracted patches."""
    a = p_ref[...]
    if compute_dtype is not None:
        a = a.astype(compute_dtype)
    o_ref[...] = jnp.dot(
        a, w_ref[...], preferred_element_type=jnp.float32
    ).astype(o_ref.dtype)


# -----------------------------------------------------------------------------
# Tiling heuristics
# -----------------------------------------------------------------------------
@functools.lru_cache(maxsize=None)
def _chip_defaults():
    """(target_rows, per-block working-set budget, vmem_limit), per generation."""
    cap = 64 << 20
    try:
        cap = int(getattr(pltpu.get_tpu_info(), "vmem_capacity_bytes", cap))
    except Exception:
        pass
    if cap >= (100 << 20):                      # v5e / v6e: 128 MiB physical VMEM
        return 2048, 20 << 20, 64 << 20
    return 1024, 10 << 20, 40 << 20             # v7x (64 MiB per TC) or unknown


def _pick_strips(S, nW, row_bytes, target_rows, budget, min_blocks=4):
    """Strips per block: big tiles within budget, but keep >= min_blocks grid
    blocks when possible (v7x has 2 TensorCores sharded over the parallel axis)."""
    rows_budget = max(nW, budget // max(row_bytes, 1))
    rows = max(nW, min(target_rows, rows_budget))
    t = max(1, min(S, rows // nW))
    t = min(t, max(1, S // min_blocks))
    while S % t:
        t -= 1
    return t


# -----------------------------------------------------------------------------
# Wrapper
# -----------------------------------------------------------------------------
@functools.partial(
    jax.jit,
    static_argnames=("patch_size", "compute_dtype", "out_dtype", "fuse_k",
                     "target_rows", "vmem_budget", "vmem_limit"),
)
def _patchify_impl(x, conv_weight, *, patch_size, compute_dtype, out_dtype,
                   fuse_k, target_rows, vmem_budget, vmem_limit):
    B, H, W, C = x.shape
    D, C_w, pk, pk2 = conv_weight.shape
    p = patch_size
    assert pk == p and pk2 == p and C_w == C, "weight / patch_size mismatch"
    assert H % p == 0 and W % p == 0, "H and W must be divisible by patch_size"
    nH, nW = H // p, W // p
    S, pC, K = B * nH, p * C, p * p * C

    # Conv2d OIHW weight -> (kh, kw, c, D).  Tiny, one-off XLA transform.
    w_khkwc = conv_weight.transpose(2, 3, 1, 0)
    if compute_dtype is not None:
        w_khkwc = w_khkwc.astype(compute_dtype)   # weight only; x stays as-is in HBM

    if nW % 8 == 0:
        # ----------------- fused fast path: image read from HBM once -----------------
        x_strips = x.reshape(S, p, nW, pC)        # free, contiguous reshape
        lanes_in = ((pC + 127) // 128) * 128
        lanes_k = ((K + 127) // 128) * 128
        row_bytes = (2 * p * lanes_in * x.dtype.itemsize      # double-buffered input
                     + p * lanes_in * 4                        # live per-kh pieces
                     + lanes_k * 4                             # im2col LHS temp
                     + 2 * D * jnp.dtype(out_dtype).itemsize)  # double-buffered output
        T = _pick_strips(S, nW, row_bytes, target_rows, vmem_budget)
        rows = T * nW

        if fuse_k:
            kern = functools.partial(_patchify_k192_kernel, rows=rows, p=p, pc=pC,
                                     compute_dtype=compute_dtype)
            w_arg = w_khkwc.reshape(K, D)
            w_spec = pl.BlockSpec((K, D), lambda i: (0, 0))
        else:
            kern = functools.partial(_patchify_kloop_kernel, rows=rows, p=p, pc=pC,
                                     compute_dtype=compute_dtype)
            w_arg = w_khkwc.reshape(p, pC, D)
            w_spec = pl.BlockSpec((p, pC, D), lambda i: (0, 0, 0))

        out = pl.pallas_call(
            kern,
            out_shape=jax.ShapeDtypeStruct((S * nW, D), out_dtype),
            grid_spec=pltpu.PrefetchScalarGridSpec(
                num_scalar_prefetch=0,
                grid=(S // T,),
                in_specs=[
                    # One contiguous slab of T row-strips per grid step.
                    pl.BlockSpec((T, p, nW, pC), lambda i: (i, 0, 0, 0)),
                    # Full flattened weight, resident in VMEM (constant index map).
                    w_spec,
                ],
                out_specs=pl.BlockSpec((rows, D), lambda i: (i, 0)),
            ),
            compiler_params=pltpu.CompilerParams(
                dimension_semantics=("parallel",),
                vmem_limit_bytes=vmem_limit,
            ),
        )(x_strips, w_arg)
        return out.reshape(B, nH, nW, D)

    # --------- fallback: XLA im2col + large-tile Pallas matmul (rare shapes) ---------
    patches = x.reshape(B, nH, p, nW, p, C).transpose(0, 1, 3, 2, 4, 5).reshape(-1, K)
    w_flat = w_khkwc.reshape(K, D)
    M = B * nH * nW
    M8 = ((M + 7) // 8) * 8
    TM = M8 if M8 <= 2048 else 1024               # small shapes: single tile, <=7 pad rows
    M_pad = ((M + TM - 1) // TM) * TM
    if M_pad != M:
        patches = jnp.pad(patches, ((0, M_pad - M), (0, 0)))
    out = pl.pallas_call(
        functools.partial(_matmul_kernel, compute_dtype=compute_dtype),
        out_shape=jax.ShapeDtypeStruct((M_pad, D), out_dtype),
        grid_spec=pltpu.PrefetchScalarGridSpec(
            num_scalar_prefetch=0,
            grid=(M_pad // TM,),
            in_specs=[pl.BlockSpec((TM, K), lambda i: (i, 0)),
                      pl.BlockSpec((K, D), lambda i: (0, 0))],
            out_specs=pl.BlockSpec((TM, D), lambda i: (i, 0)),
        ),
        compiler_params=pltpu.CompilerParams(
            dimension_semantics=("parallel",),
            vmem_limit_bytes=vmem_limit,
        ),
    )(patches, w_flat)
    return out[:M].reshape(B, nH, nW, D)


_FUSE_K_STATE = {"ok": None}   # None = untested, True/False after first attempt


def patchify_linear(x, conv_weight, *, patch_size, compute_dtype=None,
                    out_dtype=jnp.float32):
    """
    x:            (B, H, W, 3) channels-last image batch (kept in its HBM dtype)
    conv_weight:  (D, 3, p, p) PyTorch Conv2d weight (OIHW), no bias
    returns:      (B, H//p, W//p, D) in out_dtype (float32 = module semantics)
    compute_dtype: optional MXU dtype (e.g. jnp.bfloat16).  Only the tiny weight
                   is pre-cast; the LHS tile is cast in-kernel, so HBM traffic is
                   unchanged while the matmul runs at bf16 MXU rate.
    out_dtype:     set to jnp.bfloat16 to halve the output write stream on
                   memory-bound chips (accumulation stays float32 either way).
    """
    target_rows, vmem_budget, vmem_limit = _chip_defaults()
    kwargs = dict(patch_size=patch_size, compute_dtype=compute_dtype,
                  out_dtype=out_dtype, target_rows=target_rows,
                  vmem_budget=vmem_budget, vmem_limit=vmem_limit)
    if _FUSE_K_STATE["ok"] is not False:
        try:
            out = _patchify_impl(x, conv_weight, fuse_k=True, **kwargs)
            if _FUSE_K_STATE["ok"] is None:
                jax.block_until_ready(out)        # surface first-compile issues here
                _FUSE_K_STATE["ok"] = True
            return out
        except Exception:
            # TODO(synk): if the unaligned lane-concat im2col ever fails to lower
            # on some Mosaic version, degrade to the unrolled K=pC kernel (same
            # DMA structure, lower MXU utilization) instead of failing.
            _FUSE_K_STATE["ok"] = False
    return _patchify_impl(x, conv_weight, fuse_k=False, **kwargs)


# -----------------------------------------------------------------------------
# Reference + demo
# -----------------------------------------------------------------------------
def _reference(x, conv_weight, patch_size):
    """Pure-JAX reference: NCHW conv with stride == kernel, then back to NHWC."""
    x_chw = jnp.transpose(x, (0, 3, 1, 2))
    y = jax.lax.conv_general_dilated(
        x_chw, conv_weight,
        window_strides=(patch_size, patch_size), padding="VALID",
        dimension_numbers=("NCHW", "OIHW", "NCHW"))
    return jnp.transpose(y, (0, 2, 3, 1))


if __name__ == "__main__":
    root = jax.random.PRNGKey(0)
    kx1, kx2, kx3, kw = jax.random.split(root, 4)

    p, D, C = 8, 128, 3                      # D multiple of 128 -> lane-dense stores
    fan_in = C * p * p
    conv_w = jax.random.normal(kw, (D, C, p, p), jnp.float32) / jnp.sqrt(fan_in)

    # --- case 1: fused fast path, f32 (B=2, 64x64 RGB) ---
    x1 = jax.random.normal(kx1, (2, 64, 64, C), jnp.float32)
    out1 = jax.block_until_ready(patchify_linear(x1, conv_w, patch_size=p))
    ref1 = jax.block_until_ready(_reference(x1, conv_w, p))
    assert out1.shape == (2, 64 // p, 64 // p, D), out1.shape
    assert jnp.allclose(out1, ref1, atol=5e-4, rtol=5e-4), "f32 fused path mismatch"

    # --- case 2: fused path with in-kernel bf16 compute (x stays f32 in HBM) ---
    x2 = jax.random.normal(kx2, (1, 128, 128, C), jnp.float32)
    out2 = jax.block_until_ready(
        patchify_linear(x2, conv_w, patch_size=p, compute_dtype=jnp.bfloat16))
    ref2 = jax.block_until_ready(_reference(
        x2.astype(jnp.bfloat16).astype(jnp.float32),
        conv_w.astype(jnp.bfloat16).astype(jnp.float32), p))
    assert jnp.allclose(out2, ref2, atol=1e-3, rtol=1e-3), "bf16 path mismatch"

    # --- case 3: fallback path (W//p == 3, not a multiple of 8) ---
    x3 = jax.random.normal(kx3, (1, 24, 24, C), jnp.float32)
    out3 = jax.block_until_ready(patchify_linear(x3, conv_w, patch_size=p))
    ref3 = jax.block_until_ready(_reference(x3, conv_w, p))
    assert jnp.allclose(out3, ref3, atol=5e-4, rtol=5e-4), "fallback mismatch"

    print("KERNEL_OK")
</pallas_src>

<mosaic_0001>
module attributes {stable_mosaic.version = 11 : i64} {
  func.func @_patchify_k192_kernel(%arg0: i32, %arg1: memref<4x8x8x24xf32, #tpu.memory_space<vmem>>, %arg2: memref<192x128xf32, #tpu.memory_space<vmem>>, %arg3: memref<32x128xf32, #tpu.memory_space<vmem>>) attributes {dimension_semantics = [#tpu.dimension_semantics<parallel>], iteration_bounds = array<i64: 4>, scalar_prefetch = 0 : i64, scratch_operands = 0 : i64, tpu.core_type = #tpu.core_type<tc>, window_params = [{transform_indices = @transform_0, window_bounds = array<i64: 4, 8, 8, 24>}, {pipeline_mode = #tpu.pipeline_mode<synchronous>, transform_indices = @transform_1, window_bounds = array<i64: 192, 128>}, {transform_indices = @transform_2, window_bounds = array<i64: 32, 128>}]} {
    %c0 = arith.constant 0 : index
    %c0_0 = arith.constant 0 : index
    %c0_1 = arith.constant 0 : index
    %c0_2 = arith.constant 0 : index
    %0 = vector.load %arg1[%c0, %c0_0, %c0_1, %c0_2] : memref<4x8x8x24xf32, #tpu.memory_space<vmem>>, vector<4x1x8x24xf32>
    %1 = vector.shape_cast %0 : vector<4x1x8x24xf32> to vector<4x8x24xf32>
    %2 = vector.shape_cast %1 : vector<4x8x24xf32> to vector<32x24xf32>
    %c0_3 = arith.constant 0 : index
    %c1 = arith.constant 1 : index
    %c0_4 = arith.constant 0 : index
    %c0_5 = arith.constant 0 : index
    %3 = vector.load %arg1[%c0_3, %c1, %c0_4, %c0_5] : memref<4x8x8x24xf32, #tpu.memory_space<vmem>>, vector<4x1x8x24xf32>
    %4 = vector.shape_cast %3 : vector<4x1x8x24xf32> to vector<4x8x24xf32>
    %5 = vector.shape_cast %4 : vector<4x8x24xf32> to vector<32x24xf32>
    %c0_6 = arith.constant 0 : index
    %c2 = arith.constant 2 : index
    %c0_7 = arith.constant 0 : index
    %c0_8 = arith.constant 0 : index
    %6 = vector.load %arg1[%c0_6, %c2, %c0_7, %c0_8] : memref<4x8x8x24xf32, #tpu.memory_space<vmem>>, vector<4x1x8x24xf32>
    %7 = vector.shape_cast %6 : vector<4x1x8x24xf32> to vector<4x8x24xf32>
    %8 = vector.shape_cast %7 : vector<4x8x24xf32> to vector<32x24xf32>
    %c0_9 = arith.constant 0 : index
    %c3 = arith.constant 3 : index
    %c0_10 = arith.constant 0 : index
    %c0_11 = arith.constant 0 : index
    %9 = vector.load %arg1[%c0_9, %c3, %c0_10, %c0_11] : memref<4x8x8x24xf32, #tpu.memory_space<vmem>>, vector<4x1x8x24xf32>
    %10 = vector.shape_cast %9 : vector<4x1x8x24xf32> to vector<4x8x24xf32>
    %11 = vector.shape_cast %10 : vector<4x8x24xf32> to vector<32x24xf32>
    %c0_12 = arith.constant 0 : index
    %c4 = arith.constant 4 : index
    %c0_13 = arith.constant 0 : index
    %c0_14 = arith.constant 0 : index
    %12 = vector.load %arg1[%c0_12, %c4, %c0_13, %c0_14] : memref<4x8x8x24xf32, #tpu.memory_space<vmem>>, vector<4x1x8x24xf32>
    %13 = vector.shape_cast %12 : vector<4x1x8x24xf32> to vector<4x8x24xf32>
    %14 = vector.shape_cast %13 : vector<4x8x24xf32> to vector<32x24xf32>
    %c0_15 = arith.constant 0 : index
    %c5 = arith.constant 5 : index
    %c0_16 = arith.constant 0 : index
    %c0_17 = arith.constant 0 : index
    %15 = vector.load %arg1[%c0_15, %c5, %c0_16, %c0_17] : memref<4x8x8x24xf32, #tpu.memory_space<vmem>>, vector<4x1x8x24xf32>
    %16 = vector.shape_cast %15 : vector<4x1x8x24xf32> to vector<4x8x24xf32>
    %17 = vector.shape_cast %16 : vector<4x8x24xf32> to vector<32x24xf32>
    %c0_18 = arith.constant 0 : index
    %c6 = arith.constant 6 : index
    %c0_19 = arith.constant 0 : index
    %c0_20 = arith.constant 0 : index
    %18 = vector.load %arg1[%c0_18, %c6, %c0_19, %c0_20] : memref<4x8x8x24xf32, #tpu.memory_space<vmem>>, vector<4x1x8x24xf32>
    %19 = vector.shape_cast %18 : vector<4x1x8x24xf32> to vector<4x8x24xf32>
    %20 = vector.shape_cast %19 : vector<4x8x24xf32> to vector<32x24xf32>
    %c0_21 = arith.constant 0 : index
    %c7 = arith.constant 7 : index
    %c0_22 = arith.constant 0 : index
    %c0_23 = arith.constant 0 : index
    %21 = vector.load %arg1[%c0_21, %c7, %c0_22, %c0_23] : memref<4x8x8x24xf32, #tpu.memory_space<vmem>>, vector<4x1x8x24xf32>
    %22 = vector.shape_cast %21 : vector<4x1x8x24xf32> to vector<4x8x24xf32>
    %23 = vector.shape_cast %22 : vector<4x8x24xf32> to vector<32x24xf32>
    %24 = tpu.concatenate %2, %5, %8, %11, %14, %17, %20, %23 in 1 : vector<32x24xf32>, vector<32x24xf32>, vector<32x24xf32>, vector<32x24xf32>, vector<32x24xf32>, vector<32x24xf32>, vector<32x24xf32>, vector<32x24xf32> -> vector<32x192xf32>
    %c0_24 = arith.constant 0 : index
    %c0_25 = arith.constant 0 : index
    %25 = vector.load %arg2[%c0_24, %c0_25] : memref<192x128xf32, #tpu.memory_space<vmem>>, vector<192x128xf32>
    %cst = arith.constant dense<0.000000e+00> : vector<32x128xf32>
    %26 = tpu.matmul %24, %25, %cst {dimension_numbers = #tpu.dot_dimension_numbers<[1], [0], [0], [1], [0, 0, 1, 1], [], []>} : vector<32x192xf32>, vector<192x128xf32>, vector<32x128xf32> -> vector<32x128xf32>
    %c0_26 = arith.constant 0 : index
    %c0_27 = arith.constant 0 : index
    %27 = vector.load %arg3[%c0_26, %c0_27] : memref<32x128xf32, #tpu.memory_space<vmem>>, vector<32x128xf32>
    tpu.vector_store %arg3[%c0_26, %c0_27], %26 {strides = array<i32>} : memref<32x128xf32, #tpu.memory_space<vmem>>, vector<32x128xf32>,
    return
  }
  func.func @transform_0(%arg0: i32) -> (i32, i32, i32, i32) {
    %c0_i32 = arith.constant 0 : i32
    %c0_i32_0 = arith.constant 0 : i32
    %c0_i32_1 = arith.constant 0 : i32
    %c0_i32_2 = arith.constant 0 : i32
    return %arg0, %c0_i32, %c0_i32_0, %c0_i32_1 : i32, i32, i32, i32
  }
  func.func @transform_1(%arg0: i32) -> (i32, i32) {
    %c0_i32 = arith.constant 0 : i32
    %c0_i32_0 = arith.constant 0 : i32
    %c0_i32_1 = arith.constant 0 : i32
    return %c0_i32, %c0_i32_0 : i32, i32
  }
  func.func @transform_2(%arg0: i32) -> (i32, i32) {
    %c0_i32 = arith.constant 0 : i32
    %c0_i32_0 = arith.constant 0 : i32
    return %arg0, %c0_i32 : i32, i32
  }
}

module attributes {stable_mosaic.version = 11 : i64} {
  func.func @_patchify_kloop_kernel(%arg0: i32, %arg1: memref<4x8x8x24xf32, #tpu.memory_space<vmem>>, %arg2: memref<8x24x128xf32, #tpu.memory_space<vmem>>, %arg3: memref<32x128xf32, #tpu.memory_space<vmem>>) attributes {dimension_semantics = [#tpu.dimension_semantics<parallel>], iteration_bounds = array<i64: 4>, scalar_prefetch = 0 : i64, scratch_operands = 0 : i64, tpu.core_type = #tpu.core_type<tc>, window_params = [{transform_indices = @transform_0, window_bounds = array<i64: 4, 8, 8, 24>}, {pipeline_mode = #tpu.pipeline_mode<synchronous>, transform_indices = @transform_1, window_bounds = array<i64: 8, 24, 128>}, {transform_indices = @transform_2, window_bounds = array<i64: 32, 128>}]} {
    %c0 = arith.constant 0 : index
    %c0_0 = arith.constant 0 : index
    %c0_1 = arith.constant 0 : index
    %c0_2 = arith.constant 0 : index
    %0 = vector.load %arg1[%c0, %c0_0, %c0_1, %c0_2] : memref<4x8x8x24xf32, #tpu.memory_space<vmem>>, vector<4x1x8x24xf32>
    %1 = vector.shape_cast %0 : vector<4x1x8x24xf32> to vector<4x8x24xf32>
    %2 = vector.shape_cast %1 : vector<4x8x24xf32> to vector<32x24xf32>
    %c0_3 = arith.constant 0 : index
    %c0_4 = arith.constant 0 : index
    %c0_5 = arith.constant 0 : index
    %3 = vector.load %arg2[%c0_3, %c0_4, %c0_5] : memref<8x24x128xf32, #tpu.memory_space<vmem>>, vector<1x24x128xf32>
    %4 = vector.shape_cast %3 : vector<1x24x128xf32> to vector<24x128xf32>
    %cst = arith.constant dense<0.000000e+00> : vector<32x128xf32>
    %5 = tpu.matmul %2, %4, %cst {dimension_numbers = #tpu.dot_dimension_numbers<[1], [0], [0], [1], [0, 0, 1, 1], [], []>} : vector<32x24xf32>, vector<24x128xf32>, vector<32x128xf32> -> vector<32x128xf32>
    %c0_6 = arith.constant 0 : index
    %c1 = arith.constant 1 : index
    %c0_7 = arith.constant 0 : index
    %c0_8 = arith.constant 0 : index
    %6 = vector.load %arg1[%c0_6, %c1, %c0_7, %c0_8] : memref<4x8x8x24xf32, #tpu.memory_space<vmem>>, vector<4x1x8x24xf32>
    %7 = vector.shape_cast %6 : vector<4x1x8x24xf32> to vector<4x8x24xf32>
    %8 = vector.shape_cast %7 : vector<4x8x24xf32> to vector<32x24xf32>
    %c1_9 = arith.constant 1 : index
    %c0_10 = arith.constant 0 : index
    %c0_11 = arith.constant 0 : index
    %9 = vector.load %arg2[%c1_9, %c0_10, %c0_11] : memref<8x24x128xf32, #tpu.memory_space<vmem>>, vector<1x24x128xf32>
    %10 = vector.shape_cast %9 : vector<1x24x128xf32> to vector<24x128xf32>
    %cst_12 = arith.constant dense<0.000000e+00> : vector<32x128xf32>
    %11 = tpu.matmul %8, %10, %cst_12 {dimension_numbers = #tpu.dot_dimension_numbers<[1], [0], [0], [1], [0, 0, 1, 1], [], []>} : vector<32x24xf32>, vector<24x128xf32>, vector<32x128xf32> -> vector<32x128xf32>
    %12 = arith.addf %5, %11 : vector<32x128xf32>
    %c0_13 = arith.constant 0 : index
    %c2 = arith.constant 2 : index
    %c0_14 = arith.constant 0 : index
    %c0_15 = arith.constant 0 : index
    %13 = vector.load %arg1[%c0_13, %c2, %c0_14, %c0_15] : memref<4x8x8x24xf32, #tpu.memory_space<vmem>>, vector<4x1x8x24xf32>
    %14 = vector.shape_cast %13 : vector<4x1x8x24xf32> to vector<4x8x24xf32>
    %15 = vector.shape_cast %14 : vector<4x8x24xf32> to vector<32x24xf32>
    %c2_16 = arith.constant 2 : index
    %c0_17 = arith.constant 0 : index
    %c0_18 = arith.constant 0 : index
    %16 = vector.load %arg2[%c2_16, %c0_17, %c0_18] : memref<8x24x128xf32, #tpu.memory_space<vmem>>, vector<1x24x128xf32>
    %17 = vector.shape_cast %16 : vector<1x24x128xf32> to vector<24x128xf32>
    %cst_19 = arith.constant dense<0.000000e+00> : vector<32x128xf32>
    %18 = tpu.matmul %15, %17, %cst_19 {dimension_numbers = #tpu.dot_dimension_numbers<[1], [0], [0], [1], [0, 0, 1, 1], [], []>} : vector<32x24xf32>, vector<24x128xf32>, vector<32x128xf32> -> vector<32x128xf32>
    %19 = arith.addf %12, %18 : vector<32x128xf32>
    %c0_20 = arith.constant 0 : index
    %c3 = arith.constant 3 : index
    %c0_21 = arith.constant 0 : index
    %c0_22 = arith.constant 0 : index
    %20 = vector.load %arg1[%c0_20, %c3, %c0_21, %c0_22] : memref<4x8x8x24xf32, #tpu.memory_space<vmem>>, vector<4x1x8x24xf32>
    %21 = vector.shape_cast %20 : vector<4x1x8x24xf32> to vector<4x8x24xf32>
    %22 = vector.shape_cast %21 : vector<4x8x24xf32> to vector<32x24xf32>
    %c3_23 = arith.constant 3 : index
    %c0_24 = arith.constant 0 : index
    %c0_25 = arith.constant 0 : index
    %23 = vector.load %arg2[%c3_23, %c0_24, %c0_25] : memref<8x24x128xf32, #tpu.memory_space<vmem>>, vector<1x24x128xf32>
    %24 = vector.shape_cast %23 : vector<1x24x128xf32> to vector<24x128xf32>
    %cst_26 = arith.constant dense<0.000000e+00> : vector<32x128xf32>
    %25 = tpu.matmul %22, %24, %cst_26 {dimension_numbers = #tpu.dot_dimension_numbers<[1], [0], [0], [1], [0, 0, 1, 1], [], []>} : vector<32x24xf32>, vector<24x128xf32>, vector<32x128xf32> -> vector<32x128xf32>
    %26 = arith.addf %19, %25 : vector<32x128xf32>
    %c0_27 = arith.constant 0 : index
    %c4 = arith.constant 4 : index
    %c0_28 = arith.constant 0 : index
    %c0_29 = arith.constant 0 : index
    %27 = vector.load %arg1[%c0_27, %c4, %c0_28, %c0_29] : memref<4x8x8x24xf32, #tpu.memory_space<vmem>>, vector<4x1x8x24xf32>
    %28 = vector.shape_cast %27 : vector<4x1x8x24xf32> to vector<4x8x24xf32>
    %29 = vector.shape_cast %28 : vector<4x8x24xf32> to vector<32x24xf32>
    %c4_30 = arith.constant 4 : index
    %c0_31 = arith.constant 0 : index
    %c0_32 = arith.constant 0 : index
    %30 = vector.load %arg2[%c4_30, %c0_31, %c0_32] : memref<8x24x128xf32, #tpu.memory_space<vmem>>, vector<1x24x128xf32>
    %31 = vector.shape_cast %30 : vector<1x24x128xf32> to vector<24x128xf32>
    %cst_33 = arith.constant dense<0.000000e+00> : vector<32x128xf32>
    %32 = tpu.matmul %29, %31, %cst_33 {dimension_numbers = #tpu.dot_dimension_numbers<[1], [0], [0], [1], [0, 0, 1, 1], [], []>} : vector<32x24xf32>, vector<24x128xf32>, vector<32x128xf32> -> vector<32x128xf32>
    %33 = arith.addf %26, %32 : vector<32x128xf32>
    %c0_34 = arith.constant 0 : index
    %c5 = arith.constant 5 : index
    %c0_35 = arith.constant 0 : index
    %c0_36 = arith.constant 0 : index
    %34 = vector.load %arg1[%c0_34, %c5, %c0_35, %c0_36] : memref<4x8x8x24xf32, #tpu.memory_space<vmem>>, vector<4x1x8x24xf32>
    %35 = vector.shape_cast %34 : vector<4x1x8x24xf32> to vector<4x8x24xf32>
    %36 = vector.shape_cast %35 : vector<4x8x24xf32> to vector<32x24xf32>
    %c5_37 = arith.constant 5 : index
    %c0_38 = arith.constant 0 : index
    %c0_39 = arith.constant 0 : index
    %37 = vector.load %arg2[%c5_37, %c0_38, %c0_39] : memref<8x24x128xf32, #tpu.memory_space<vmem>>, vector<1x24x128xf32>
    %38 = vector.shape_cast %37 : vector<1x24x128xf32> to vector<24x128xf32>
    %cst_40 = arith.constant dense<0.000000e+00> : vector<32x128xf32>
    %39 = tpu.matmul %36, %38, %cst_40 {dimension_numbers = #tpu.dot_dimension_numbers<[1], [0], [0], [1], [0, 0, 1, 1], [], []>} : vector<32x24xf32>, vector<24x128xf32>, vector<32x128xf32> -> vector<32x128xf32>
    %40 = arith.addf %33, %39 : vector<32x128xf32>
    %c0_41 = arith.constant 0 : index
    %c6 = arith.constant 6 : index
    %c0_42 = arith.constant 0 : index
    %c0_43 = arith.constant 0 : index
    %41 = vector.load %arg1[%c0_41, %c6, %c0_42, %c0_43] : memref<4x8x8x24xf32, #tpu.memory_space<vmem>>, vector<4x1x8x24xf32>
    %42 = vector.shape_cast %41 : vector<4x1x8x24xf32> to vector<4x8x24xf32>
    %43 = vector.shape_cast %42 : vector<4x8x24xf32> to vector<32x24xf32>
    %c6_44 = arith.constant 6 : index
    %c0_45 = arith.constant 0 : index
    %c0_46 = arith.constant 0 : index
    %44 = vector.load %arg2[%c6_44, %c0_45, %c0_46] : memref<8x24x128xf32, #tpu.memory_space<vmem>>, vector<1x24x128xf32>
    %45 = vector.shape_cast %44 : vector<1x24x128xf32> to vector<24x128xf32>
    %cst_47 = arith.constant dense<0.000000e+00> : vector<32x128xf32>
    %46 = tpu.matmul %43, %45, %cst_47 {dimension_numbers = #tpu.dot_dimension_numbers<[1], [0], [0], [1], [0, 0, 1, 1], [], []>} : vector<32x24xf32>, vector<24x128xf32>, vector<32x128xf32> -> vector<32x128xf32>
    %47 = arith.addf %40, %46 : vector<32x128xf32>
    %c0_48 = arith.constant 0 : index
    %c7 = arith.constant 7 : index
    %c0_49 = arith.constant 0 : index
    %c0_50 = arith.constant 0 : index
    %48 = vector.load %arg1[%c0_48, %c7, %c0_49, %c0_50] : memref<4x8x8x24xf32, #tpu.memory_space<vmem>>, vector<4x1x8x24xf32>
    %49 = vector.shape_cast %48 : vector<4x1x8x24xf32> to vector<4x8x24xf32>
    %50 = vector.shape_cast %49 : vector<4x8x24xf32> to vector<32x24xf32>
    %c7_51 = arith.constant 7 : index
    %c0_52 = arith.constant 0 : index
    %c0_53 = arith.constant 0 : index
    %51 = vector.load %arg2[%c7_51, %c0_52, %c0_53] : memref<8x24x128xf32, #tpu.memory_space<vmem>>, vector<1x24x128xf32>
    %52 = vector.shape_cast %51 : vector<1x24x128xf32> to vector<24x128xf32>
    %cst_54 = arith.constant dense<0.000000e+00> : vector<32x128xf32>
    %53 = tpu.matmul %50, %52, %cst_54 {dimension_numbers = #tpu.dot_dimension_numbers<[1], [0], [0], [1], [0, 0, 1, 1], [], []>} : vector<32x24xf32>, vector<24x128xf32>, vector<32x128xf32> -> vector<32x128xf32>
    %54 = arith.addf %47, %53 : vector<32x128xf32>
    %c0_55 = arith.constant 0 : index
    %c0_56 = arith.constant 0 : index
    %55 = vector.load %arg3[%c0_55, %c0_56] : memref<32x128xf32, #tpu.memory_space<vmem>>, vector<32x128xf32>
    tpu.vector_store %arg3[%c0_55, %c0_56], %54 {strides = array<i32>} : memref<32x128xf32, #tpu.memory_space<vmem>>, vector<32x128xf32>,
    return
  }
  func.func @transform_0(%arg0: i32) -> (i32, i32, i32, i32) {
    %c0_i32 = arith.constant 0 : i32
    %c0_i32_0 = arith.constant 0 : i32
    %c0_i32_1 = arith.constant 0 : i32
    %c0_i32_2 = arith.constant 0 : i32
    return %arg0, %c0_i32, %c0_i32_0, %c0_i32_1 : i32, i32, i32, i32
  }
  func.func @transform_1(%arg0: i32) -> (i32, i32, i32) {
    %c0_i32 = arith.constant 0 : i32
    %c0_i32_0 = arith.constant 0 : i32
    %c0_i32_1 = arith.constant 0 : i32
    %c0_i32_2 = arith.constant 0 : i32
    return %c0_i32, %c0_i32_0, %c0_i32_1 : i32, i32, i32
  }
  func.func @transform_2(%arg0: i32) -> (i32, i32) {
    %c0_i32 = arith.constant 0 : i32
    %c0_i32_0 = arith.constant 0 : i32
    return %arg0, %c0_i32 : i32, i32
  }
}

</mosaic_0001>

<llo_original>
// kernel: _patchify_impl.1
$region0: #{_patchify_impl.1}
  #allocation0 [shape = 'u32[]', space=smem, size = 0x4, offset = 0x4, fixed_abs, tag = 'smem constant byte address 0x4 - core index']
  #allocation1 [shape = 'u32[72,128]{1,0:T(1,128)}', space=vmem, size = 0x9000, scoped, tag = 'internal scratch']
  %s0 = inlined_call_operand.vmem [shape: f32[16,8,8,24], index: 0, kind: input, shape index: {}]
  %s1 = inlined_call_operand.vmem [shape: f32[192,128], index: 1, kind: input, shape index: {}]
  %s2 = inlined_call_operand.hbm [shape: f32[128,128], index: 2, kind: output, shape index: {}]
  %s3 = sld [smem:[#allocation0]]
  $region41: #{_patchify_impl.1} parent=0
    _
  %s5 = ssub.s32 1, %s3
  %s6 = scalar_select 0, %s5, %s3
  $region1: #{_patchify_impl.1} parent=0
    #allocation2 [shape = 'u8[32768]{0}', space=vmem, size = 0x8000, scoped, tag = 'output window, operand 0']
    #allocation3 [shape = 's32[2]{0}', space=sflag, size = 0x8, scoped, tag = 'scoped memory for _patchify_impl.1']
    %7 = vsyncpa [#allocation3], 0
    %s8 = scalar_lea.sflag [#allocation3], 1
    %9 = vsyncpa %s8, 0
    loop: start=0, step=1, limit=6
    $region2: #{_patchify_impl.1} parent=1 // loop_pre_header
      _
    $region3: #{_patchify_impl.1} parent=1 // loop_header
      %s11 = sphi 0, %s15
      %p12 = scmp.ge.s32.totalorder %s11, 6
      %s21 = sphi 0, %s23
      %s24 = sphi 0, %s21
      %s25 = sphi 0, %s24
      %s41 = sphi 0, %s25
      %s45 = sphi 0, %s45
      %s47 = sphi 0, %s45
      %s48 = sphi 0, %s47
      %s62 = sphi 0, %s48
      %s68 = sphi 0, %s70
      %s71 = sphi 0, %s68
      %s72 = sphi 0, %s71
      %s88 = sphi 0, %s72
    $region4: #{_patchify_impl.1} parent=1 // loop_header_branch
      %14 = sbr.rel (%p12) target = $region8
    $region5: #{_patchify_impl.1} parent=1 // loop_body
      %s16 = ssub.s32 %s11, 1
      %s17 = ssub.s32 %s11, 2
      %s18 = sadd.s32 %s11, 1
      %s19 = ssub.s32 %s11, %s18
      %p20 = scmp.eq.s32.totalorder %s19, 0
      %s22 = sadd.s32 %s21, 1
      %s23 = scalar_select %p20, %s21, %s22
      %p26 = pneg %p20
      %p27 = scmp.eq.s32.totalorder %s11, 3
      %p28 = por %p26, %p27
      %p29 = scmp.ne.s32.totalorder %s21, %s24
      %p30 = scmp.eq.s32.totalorder %s11, 0
      %p31 = por %p29, %p30
      %p32 = scmp.ne.s32.totalorder %s21, %s24
      %p33 = scmp.eq.s32.totalorder %s16, 3
      %p34 = por %p32, %p33
      %p35 = scmp.ne.s32.totalorder %s24, %s25
      %p36 = scmp.eq.s32.totalorder %s16, 0
      %p37 = por %p35, %p36
      %p38 = scmp.ne.s32.totalorder %s24, %s25
      %p39 = scmp.eq.s32.totalorder %s17, 3
      %p40 = por %p38, %p39
      %p42 = scmp.ne.s32.totalorder %s25, %s41
      %p43 = scmp.eq.s32.totalorder %s17, 0
      %p44 = por %p42, %p43
      %s46 = sadd.s32 %s45, 1
      %p49 = scmp.eq.s32.totalorder %s11, 3
      %p50 = scmp.ne.s32.totalorder %s45, %s47
      %p51 = scmp.eq.s32.totalorder %s11, 0
      %p52 = por %p50, %p51
      %p53 = scmp.ne.s32.totalorder %s45, %s47
      %p54 = scmp.eq.s32.totalorder %s16, 3
      %p55 = por %p53, %p54
      %p56 = scmp.ne.s32.totalorder %s47, %s48
      %p57 = scmp.eq.s32.totalorder %s16, 0
      %p58 = por %p56, %p57
      %p59 = scmp.ne.s32.totalorder %s47, %s48
      %p60 = scmp.eq.s32.totalorder %s17, 3
      %p61 = por %p59, %p60
      %p63 = scmp.ne.s32.totalorder %s48, %s62
      %p64 = scmp.eq.s32.totalorder %s17, 0
      %p65 = por %p63, %p64
      %s66 = ssub.s32 %s11, %s18
      %p67 = scmp.eq.s32.totalorder %s66, 0
      %s69 = sadd.s32 %s68, 1
      %s70 = scalar_select %p67, %s68, %s69
      %p73 = pneg %p67
      %p74 = scmp.eq.s32.totalorder %s11, 3
      %p75 = por %p73, %p74
      %p76 = scmp.ne.s32.totalorder %s68, %s71
      %p77 = scmp.eq.s32.totalorder %s11, 0
      %p78 = por %p76, %p77
      %p79 = scmp.ne.s32.totalorder %s68, %s71
      %p80 = scmp.eq.s32.totalorder %s16, 3
      %p81 = por %p79, %p80
      %p82 = scmp.ne.s32.totalorder %s71, %s72
      %p83 = scmp.eq.s32.totalorder %s16, 0
      %p84 = por %p82, %p83
      %p85 = scmp.ne.s32.totalorder %s71, %s72
      %p86 = scmp.eq.s32.totalorder %s17, 3
      %p87 = por %p85, %p86
      %p89 = scmp.ne.s32.totalorder %s72, %s88
      %p90 = scmp.eq.s32.totalorder %s17, 0
      %p91 = por %p89, %p90
      %p92 = scmp.le.s32.totalorder 1, %s11
      %p93 = scmp.lt.s32.totalorder %s11, 5
      %p94 = pnand %p92, %p93
      %p95 = pneg %p94
      // Predicated region
      $region9: #{_patchify_impl.1} parent=5 // pred_check
        _
      $region10: #{_patchify_impl.1} parent=5 // pred_check_branch
        %97 = sbr.rel (%p94) target = $region12
      $region11: #{_patchify_impl.1} parent=5 // pred_region
        %s98 = ssub.s32 %s11, 1
        // Predicated region
        $region13: #{_patchify_impl.1} parent=11 // pred_check
          %p99 = pneg %p58
        $region14: #{_patchify_impl.1} parent=11 // pred_check_branch
          %101 = sbr.rel (%p99) target = $region16
        $region15: #{_patchify_impl.1} parent=11 // pred_region
          _
        $region16: #{_patchify_impl.1} parent=11 // pred_fallthru
          _
      $region12: #{_patchify_impl.1} parent=5 // pred_fallthru
        _
      %p102 = scmp.lt.s32.totalorder %s11, 4
      // Predicated region
      $region17: #{_patchify_impl.1} parent=5 // pred_check
        %p103 = pneg %p102
      $region18: #{_patchify_impl.1} parent=5 // pred_check_branch
        %105 = sbr.rel (%p103) target = $region20
      $region19: #{_patchify_impl.1} parent=5 // pred_region
        // Predicated region
        $region21: #{_patchify_impl.1} parent=19 // pred_check
          %p106 = pneg %p31
        $region22: #{_patchify_impl.1} parent=19 // pred_check_branch
          %108 = sbr.rel (%p106) target = $region24
        $region23: #{_patchify_impl.1} parent=19 // pred_region
          %s109 = smul.u32 4, %s11
          %p110 = scmp.lt.s32.totalorder %s109, 15
          %s111 = scalar_select %p110, %s109, 15
          %s112 = smul.addr %s111, 8
          %s113 = smul.addr %s112, 8
          %s114 = scalar_lea.vmem %s0, %s113
          %s115 = smul.u32 4, %s11
        $region24: #{_patchify_impl.1} parent=19 // pred_fallthru
          _
      $region20: #{_patchify_impl.1} parent=5 // pred_fallthru
        _
      %p116 = scmp.le.s32.totalorder 1, %s11
      %p117 = scmp.lt.s32.totalorder %s11, 5
      %p118 = pnand %p116, %p117
      %p119 = pneg %p118
      // Predicated region
      $region25: #{_patchify_impl.1} parent=5 // pred_check
        _
      $region26: #{_patchify_impl.1} parent=5 // pred_check_branch
        %121 = sbr.rel (%p118) target = $region28
      $region27: #{_patchify_impl.1} parent=5 // pred_region
        %s122 = ssub.s32 %s11, 1
        %s123 = smul.u32 4, %s16
        %p124 = scmp.lt.s32.totalorder %s123, 15
        %s125 = scalar_select %p124, %s123, 15
        %s126 = smul.addr %s125, 8
        %s127 = smul.addr %s126, 8
        %s128 = scalar_lea.vmem %s0, %s127
        %p129 = pneg %p37
        %p130 = pneg %p34
        %p131 = pneg %p58
        %p132 = pneg %p55
        %p133 = pneg %p84
        %p134 = pneg %p81
        %s135 = sand.u32 %s71, 1
        %s136 = scalar_lea.sflag [#allocation3], %s135
        %s137 = sand.u32 %s71, 1
        %s138 = smul.addr %s137, 32
        %s139 = scalar_lea.vmem [#allocation2], %s138
        %s140 = smul.u32 4, %s16
        %p141 = scmp.lt.s32.totalorder %s140, 15
        %s142 = scalar_select %p141, %s140, 15
        %s143 = smul.addr %s142, 8
        %s144 = smul.addr %s143, 8
        %s145 = scalar_lea.vmem %s0, %s144
        %s146 = smul.u32 4, %s16
        %s147 = smul.u32 4, %s16
        %v148 = vld [vmem:[%s145] sm:$0xff]
        %v149 = vld [vmem:[%s145 + $0x40] sm:$0xff]
        %v150 = vld [vmem:[%s145 + $0x80] sm:$0xff]
        %v151 = vld [vmem:[%s145 + $0xc0] sm:$0xff]
        %s152 = scalar_lea.vmem %s145, 8
        %v153 = vld [vmem:[%s152] sm:$0xff]
        %v154 = vld [vmem:[%s152 + $0x40] sm:$0xff]
        %v155 = vld [vmem:[%s152 + $0x80] sm:$0xff]
        %v156 = vld [vmem:[%s152 + $0xc0] sm:$0xff]
        %s157 = scalar_lea.vmem %s145, 16
        %v158 = vld [vmem:[%s157] sm:$0xff]
        %v159 = vld [vmem:[%s157 + $0x40] sm:$0xff]
        %v160 = vld [vmem:[%s157 + $0x80] sm:$0xff]
        %v161 = vld [vmem:[%s157 + $0xc0] sm:$0xff]
        %s162 = scalar_lea.vmem %s145, 24
        %v163 = vld [vmem:[%s162] sm:$0xff]
        %v164 = vld [vmem:[%s162 + $0x40] sm:$0xff]
        %v165 = vld [vmem:[%s162 + $0x80] sm:$0xff]
        %v166 = vld [vmem:[%s162 + $0xc0] sm:$0xff]
        %s167 = scalar_lea.vmem %s145, 32
        %v168 = vld [vmem:[%s167] sm:$0xff]
        %v169 = vld [vmem:[%s167 + $0x40] sm:$0xff]
        %v170 = vld [vmem:[%s167 + $0x80] sm:$0xff]
        %v171 = vld [vmem:[%s167 + $0xc0] sm:$0xff]
        %s172 = scalar_lea.vmem %s145, 40
        %v173 = vld [vmem:[%s172] sm:$0xff]
        %v174 = vld [vmem:[%s172 + $0x40] sm:$0xff]
        %v175 = vld [vmem:[%s172 + $0x80] sm:$0xff]
        %v176 = vld [vmem:[%s172 + $0xc0] sm:$0xff]
        %s177 = scalar_lea.vmem %s145, 48
        %v178 = vld [vmem:[%s177] sm:$0xff]
        %v179 = vld [vmem:[%s177 + $0x40] sm:$0xff]
        %v180 = vld [vmem:[%s177 + $0x80] sm:$0xff]
        %v181 = vld [vmem:[%s177 + $0xc0] sm:$0xff]
        %s182 = scalar_lea.vmem %s145, 56
        %v183 = vld [vmem:[%s182] sm:$0xff]
        %v184 = vld [vmem:[%s182 + $0x40] sm:$0xff]
        %v185 = vld [vmem:[%s182 + $0x80] sm:$0xff]
        %v186 = vld [vmem:[%s182 + $0xc0] sm:$0xff]
        %191 = vrot.lane.b32.xlu0 %v153, 24
        %v192 = vpop.permute.xlu0 %191
        %193 = vrot.lane.b32.xlu0 %v154, 24
        %v194 = vpop.permute.xlu0 %193
        %195 = vrot.lane.b32.xlu0 %v155, 24
        %v196 = vpop.permute.xlu0 %195
        %197 = vrot.lane.b32.xlu0 %v156, 24
        %v198 = vpop.permute.xlu0 %197
        %207 = vrot.lane.b32.xlu0 %v158, 48
        %v208 = vpop.permute.xlu0 %207
        %209 = vrot.lane.b32.xlu0 %v159, 48
        %v210 = vpop.permute.xlu0 %209
        %211 = vrot.lane.b32.xlu0 %v160, 48
        %v212 = vpop.permute.xlu0 %211
        %213 = vrot.lane.b32.xlu0 %v161, 48
        %v214 = vpop.permute.xlu0 %213
        %223 = vrot.lane.b32.xlu0 %v163, 72
        %v224 = vpop.permute.xlu0 %223
        %225 = vrot.lane.b32.xlu0 %v164, 72
        %v226 = vpop.permute.xlu0 %225
        %227 = vrot.lane.b32.xlu0 %v165, 72
        %v228 = vpop.permute.xlu0 %227
        %229 = vrot.lane.b32.xlu0 %v166, 72
        %v230 = vpop.permute.xlu0 %229
        %239 = vrot.lane.b32.xlu0 %v168, 96
        %v240 = vpop.permute.xlu0 %239
        %241 = vrot.lane.b32.xlu0 %v169, 96
        %v242 = vpop.permute.xlu0 %241
        %243 = vrot.lane.b32.xlu0 %v170, 96
        %v244 = vpop.permute.xlu0 %243
        %245 = vrot.lane.b32.xlu0 %v171, 96
        %v246 = vpop.permute.xlu0 %245
        %255 = vrot.lane.b32.xlu0 %v173, 120
        %v256 = vpop.permute.xlu0 %255
        %257 = vrot.lane.b32.xlu0 %v174, 120
        %v258 = vpop.permute.xlu0 %257
        %259 = vrot.lane.b32.xlu0 %v175, 120
        %v260 = vpop.permute.xlu0 %259
        %261 = vrot.lane.b32.xlu0 %v176, 120
        %v262 = vpop.permute.xlu0 %261
        %271 = vrot.lane.b32.xlu0 %v178, 16
        %v272 = vpop.permute.xlu0 %271
        %273 = vrot.lane.b32.xlu0 %v179, 16
        %v274 = vpop.permute.xlu0 %273
        %275 = vrot.lane.b32.xlu0 %v180, 16
        %v276 = vpop.permute.xlu0 %275
        %277 = vrot.lane.b32.xlu0 %v181, 16
        %v278 = vpop.permute.xlu0 %277
        %287 = vrot.lane.b32.xlu0 %v183, 40
        %v288 = vpop.permute.xlu0 %287
        %289 = vrot.lane.b32.xlu0 %v184, 40
        %v290 = vpop.permute.xlu0 %289
        %291 = vrot.lane.b32.xlu0 %v185, 40
        %v292 = vpop.permute.xlu0 %291
        %293 = vrot.lane.b32.xlu0 %v186, 40
        %v294 = vpop.permute.xlu0 %293
        %vm299 = vcmask 195584
        %v300 = vsel %vm299, %v148, %v192
        %v301 = vsel %vm299, %v149, %v194
        %v302 = vsel %vm299, %v150, %v196
        %v303 = vsel %vm299, %v151, %v198
        %vm304 = vcmask 392192
        %v305 = vsel %vm304, %v300, %v208
        %v306 = vsel %vm304, %v301, %v210
        %v307 = vsel %vm304, %v302, %v212
        %v308 = vsel %vm304, %v303, %v214
        %vm309 = vcmask 588800
        %v310 = vsel %vm309, %v305, %v224
        %v311 = vsel %vm309, %v306, %v226
        %v312 = vsel %vm309, %v307, %v228
        %v313 = vsel %vm309, %v308, %v230
        %vm314 = vcmask 785408
        %v315 = vsel %vm314, %v310, %v240
        %v316 = vsel %vm314, %v311, %v242
        %v317 = vsel %vm314, %v312, %v244
        %v318 = vsel %vm314, %v313, %v246
        %vm319 = vcmask 982016
        %v320 = vsel %vm319, %v315, %v256
        %v321 = vsel %vm319, %v316, %v258
        %v322 = vsel %vm319, %v317, %v260
        %v323 = vsel %vm319, %v318, %v262
        %vm324 = vcmask 130048
        %v325 = vsel %vm324, %v256, %v272
        %v326 = vsel %vm324, %v258, %v274
        %v327 = vsel %vm324, %v260, %v276
        %v328 = vsel %vm324, %v262, %v278
        %vm329 = vcmask 326656
        %v330 = vsel %vm329, %v325, %v288
        %v331 = vsel %vm329, %v326, %v290
        %v332 = vsel %vm329, %v327, %v292
        %v333 = vsel %vm329, %v328, %v294
        %v334 = vld [vmem:[%s1] sm:$0xff]
        %v335 = vld [vmem:[%s1 + $0x8] sm:$0xff]
        %v336 = vld [vmem:[%s1 + $0x10] sm:$0xff]
        %v337 = vld [vmem:[%s1 + $0x18] sm:$0xff]
        %v338 = vld [vmem:[%s1 + $0x20] sm:$0xff]
        %v339 = vld [vmem:[%s1 + $0x28] sm:$0xff]
        %v340 = vld [vmem:[%s1 + $0x30] sm:$0xff]
        %v341 = vld [vmem:[%s1 + $0x38] sm:$0xff]
        %v342 = vld [vmem:[%s1 + $0x40] sm:$0xff]
        %v343 = vld [vmem:[%s1 + $0x48] sm:$0xff]
        %v344 = vld [vmem:[%s1 + $0x50] sm:$0xff]
        %v345 = vld [vmem:[%s1 + $0x58] sm:$0xff]
        %v346 = vld [vmem:[%s1 + $0x60] sm:$0xff]
        %v347 = vld [vmem:[%s1 + $0x68] sm:$0xff]
        %v348 = vld [vmem:[%s1 + $0x70] sm:$0xff]
        %v349 = vld [vmem:[%s1 + $0x78] sm:$0xff]
        %v350 = vld [vmem:[%s1 + $0x80] sm:$0xff]
        %v351 = vld [vmem:[%s1 + $0x88] sm:$0xff]
        %v352 = vld [vmem:[%s1 + $0x90] sm:$0xff]
        %v353 = vld [vmem:[%s1 + $0x98] sm:$0xff]
        %v354 = vld [vmem:[%s1 + $0xa0] sm:$0xff]
        %v355 = vld [vmem:[%s1 + $0xa8] sm:$0xff]
        %v356 = vld [vmem:[%s1 + $0xb0] sm:$0xff]
        %v357 = vld [vmem:[%s1 + $0xb8] sm:$0xff]
        %vm358 = vcmask 523264
        %v360 = vsel %vm358, %v330, 0
        %v363 = vsel %vm358, %v331, 0
        %v366 = vsel %vm358, %v332, 0
        %v369 = vsel %vm358, %v333, 0
        %371 = vmatpush.msra.mxu0 %v349
        %372 = vmatpush.msra.mxu0 %v348
        %373 = vmatpush.msra.mxu0 %v347
        %374 = vmatpush.msra.mxu0 %v346
        %375 = vmatpush.msra.mxu0 %v345
        %376 = vmatpush.msra.mxu0 %v344
        %377 = vmatpush.msra.mxu0 %v343
        %378 = vmatpush.msra.mxu0 %v342
        %379 = vmatpush.msra.mxu0 %v341
        %380 = vmatpush.msra.mxu0 %v340
        %381 = vmatpush.msra.mxu0 %v339
        %382 = vmatpush.msra.mxu0 %v338
        %383 = vmatpush.msra.mxu0 %v337
        %384 = vmatpush.msra.mxu0 %v336
        %385 = vmatpush.msra.mxu0 %v335
        %386 = vmatpush.msra.mxu0 %v334
        %387 = vmatmul.f32.gmra.mxu0 %v320
        %v388 = vpop.f32.mrf.mxu0
        %v389 = vadd.f32 0.0, %v388
        %390 = vmatmul.f32.gmra.mxu0 %v321
        %v391 = vpop.f32.mrf.mxu0
        %v392 = vadd.f32 0.0, %v391
        %393 = vmatmul.f32.gmra.mxu0 %v322
        %v394 = vpop.f32.mrf.mxu0
        %v395 = vadd.f32 0.0, %v394
        %396 = vmatmul.f32.gmra.mxu0 %v323
        %v397 = vpop.f32.mrf.mxu0
        %v398 = vadd.f32 0.0, %v397
        %399 = vdwg.mxu0
        %400 = vmatpush.msra.mxu0 0.0
        %401 = vmatpush.msra.mxu0 0.0
        %402 = vmatpush.msra.mxu0 0.0
        %403 = vmatpush.msra.mxu0 0.0
        %404 = vmatpush.msra.mxu0 0.0
        %405 = vmatpush.msra.mxu0 0.0
        %406 = vmatpush.msra.mxu0 0.0
        %407 = vmatpush.msra.mxu0 0.0
        %408 = vmatpush.msra.mxu0 %v357
        %409 = vmatpush.msra.mxu0 %v356
        %410 = vmatpush.msra.mxu0 %v355
        %411 = vmatpush.msra.mxu0 %v354
        %412 = vmatpush.msra.mxu0 %v353
        %413 = vmatpush.msra.mxu0 %v352
        %414 = vmatpush.msra.mxu0 %v351
        %415 = vmatpush.msra.mxu0 %v350
        %416 = vmatmul.f32.gmra.mxu0 %v360
        %v417 = vpop.f32.mrf.mxu0
        %v418 = vadd.f32 %v389, %v417
        %419 = vmatmul.f32.gmra.mxu0 %v363
        %v420 = vpop.f32.mrf.mxu0
        %v421 = vadd.f32 %v392, %v420
        %422 = vmatmul.f32.gmra.mxu0 %v366
        %v423 = vpop.f32.mrf.mxu0
        %v424 = vadd.f32 %v395, %v423
        %425 = vmatmul.f32.gmra.mxu0 %v369
        %v426 = vpop.f32.mrf.mxu0
        %v427 = vadd.f32 %v398, %v426
        %428 = vdwg.mxu0
        %429 = vst [vmem:[%s139] sm:$0xff] %v418
        %430 = vst [vmem:[%s139 + $0x8] sm:$0xff] %v421
        %431 = vst [vmem:[%s139 + $0x10] sm:$0xff] %v424
        %432 = vst [vmem:[%s139 + $0x18] sm:$0xff] %v427
        %s433 = sand.u32 %s71, 1
        %s434 = scalar_lea.sflag [#allocation3], %s433
        %s435 = sand.u32 %s71, 1
        %s436 = smul.addr %s435, 32
        %s437 = scalar_lea.vmem [#allocation2], %s436
        // Predicated region
        $region29: #{_patchify_impl.1} parent=27 // pred_check
          %p438 = pneg %p81
        $region30: #{_patchify_impl.1} parent=27 // pred_check_branch
          %440 = sbr.rel (%p438) target = $region32
        $region31: #{_patchify_impl.1} parent=27 // pred_region
          %s441 = smul.u32 4, %s16
          %443 = vsyncadd %s434, 0
          %s444 = smul.addr %s441, 8
          %s445 = scalar_lea.hbm %s2, %s444
          %s446 = sshll.u32 %s437, 4
          %s447 = int_to_ptr.vmem [resolvable:$true] %s446
          %s448 = sshll.u32 %s445, 4
          %s449 = int_to_ptr.hbm [resolvable:$true] %s448
          %454 = dma.vmem_to_hbm [thread:$0]  %s447, 512, %s449, %s434, 128, 128, 8
        $region32: #{_patchify_impl.1} parent=27 // pred_fallthru
          _
      $region28: #{_patchify_impl.1} parent=5 // pred_fallthru
        _
      %p455 = scmp.le.s32.totalorder 2, %s11
      // Predicated region
      $region33: #{_patchify_impl.1} parent=5 // pred_check
        %p456 = pneg %p455
      $region34: #{_patchify_impl.1} parent=5 // pred_check_branch
        %458 = sbr.rel (%p456) target = $region36
      $region35: #{_patchify_impl.1} parent=5 // pred_region
        %s459 = ssub.s32 %s11, 2
        // Predicated region
        $region37: #{_patchify_impl.1} parent=35 // pred_check
          %p460 = pneg %p87
        $region38: #{_patchify_impl.1} parent=35 // pred_check_branch
          %462 = sbr.rel (%p460) target = $region40
        $region39: #{_patchify_impl.1} parent=35 // pred_region
          %s463 = sand.u32 %s72, 1
          %s464 = scalar_lea.sflag [#allocation3], %s463
          %s465 = sand.u32 %s72, 1
          %s466 = smul.addr %s465, 32
          %s467 = scalar_lea.vmem [#allocation2], %s466
          %469 = dma.done %s464, 512
        $region40: #{_patchify_impl.1} parent=35 // pred_fallthru
          _
      $region36: #{_patchify_impl.1} parent=5 // pred_fallthru
        _
    $region6: #{_patchify_impl.1} parent=1 // loop_footer
      %s15 = sadd.s32 1, %s11
    $region7: #{_patchify_impl.1} parent=1 // loop_footer_branch
      %10 = sbr.rel target = $region3
    $region8: #{_patchify_impl.1} parent=1 // loop_exit
      _
    %470 = vsyncpa [#allocation3], 1
    %s471 = scalar_lea.sflag [#allocation3], 1
    %472 = vsyncpa %s471, 1

// kernel: _patchify_impl.1
$region0: #{_patchify_impl.1}
  #allocation0 [shape = 'u32[]', space=smem, size = 0x4, offset = 0x4, fixed_abs, tag = 'smem constant byte address 0x4 - core index']
  #allocation1 [shape = 'u32[72,128]{1,0:T(1,128)}', space=vmem, size = 0x9000, scoped, tag = 'internal scratch']
  %s0 = inlined_call_operand.vmem [shape: f32[16,8,8,24], index: 0, kind: input, shape index: {}]
  %s1 = inlined_call_operand.vmem [shape: f32[8,24,128], index: 1, kind: input, shape index: {}]
  %s2 = inlined_call_operand.hbm [shape: f32[128,128], index: 2, kind: output, shape index: {}]
  %s3 = sld [smem:[#allocation0]]
  $region41: #{_patchify_impl.1} parent=0
    _
  %s5 = ssub.s32 1, %s3
  %s6 = scalar_select 0, %s5, %s3
  $region1: #{_patchify_impl.1} parent=0
    #allocation2 [shape = 'u8[32768]{0}', space=vmem, size = 0x8000, scoped, tag = 'output window, operand 0']
    #allocation3 [shape = 's32[2]{0}', space=sflag, size = 0x8, scoped, tag = 'scoped memory for _patchify_impl.1']
    %7 = vsyncpa [#allocation3], 0
    %s8 = scalar_lea.sflag [#allocation3], 1
    %9 = vsyncpa %s8, 0
    loop: start=0, step=1, limit=6
    $region2: #{_patchify_impl.1} parent=1 // loop_pre_header
      _
    $region3: #{_patchify_impl.1} parent=1 // loop_header
      %s11 = sphi 0, %s15
      %p12 = scmp.ge.s32.totalorder %s11, 6
      %s21 = sphi 0, %s23
      %s24 = sphi 0, %s21
      %s25 = sphi 0, %s24
      %s41 = sphi 0, %s25
      %s45 = sphi 0, %s45
      %s47 = sphi 0, %s45
      %s48 = sphi 0, %s47
      %s62 = sphi 0, %s48
      %s68 = sphi 0, %s70
      %s71 = sphi 0, %s68
      %s72 = sphi 0, %s71
      %s88 = sphi 0, %s72
    $region4: #{_patchify_impl.1} parent=1 // loop_header_branch
      %14 = sbr.rel (%p12) target = $region8
    $region5: #{_patchify_impl.1} parent=1 // loop_body
      %s16 = ssub.s32 %s11, 1
      %s17 = ssub.s32 %s11, 2
      %s18 = sadd.s32 %s11, 1
      %s19 = ssub.s32 %s11, %s18
      %p20 = scmp.eq.s32.totalorder %s19, 0
      %s22 = sadd.s32 %s21, 1
      %s23 = scalar_select %p20, %s21, %s22
      %p26 = pneg %p20
      %p27 = scmp.eq.s32.totalorder %s11, 3
      %p28 = por %p26, %p27
      %p29 = scmp.ne.s32.totalorder %s21, %s24
      %p30 = scmp.eq.s32.totalorder %s11, 0
      %p31 = por %p29, %p30
      %p32 = scmp.ne.s32.totalorder %s21, %s24
      %p33 = scmp.eq.s32.totalorder %s16, 3
      %p34 = por %p32, %p33
      %p35 = scmp.ne.s32.totalorder %s24, %s25
      %p36 = scmp.eq.s32.totalorder %s16, 0
      %p37 = por %p35, %p36
      %p38 = scmp.ne.s32.totalorder %s24, %s25
      %p39 = scmp.eq.s32.totalorder %s17, 3
      %p40 = por %p38, %p39
      %p42 = scmp.ne.s32.totalorder %s25, %s41
      %p43 = scmp.eq.s32.totalorder %s17, 0
      %p44 = por %p42, %p43
      %s46 = sadd.s32 %s45, 1
      %p49 = scmp.eq.s32.totalorder %s11, 3
      %p50 = scmp.ne.s32.totalorder %s45, %s47
      %p51 = scmp.eq.s32.totalorder %s11, 0
      %p52 = por %p50, %p51
      %p53 = scmp.ne.s32.totalorder %s45, %s47
      %p54 = scmp.eq.s32.totalorder %s16, 3
      %p55 = por %p53, %p54
      %p56 = scmp.ne.s32.totalorder %s47, %s48
      %p57 = scmp.eq.s32.totalorder %s16, 0
      %p58 = por %p56, %p57
      %p59 = scmp.ne.s32.totalorder %s47, %s48
      %p60 = scmp.eq.s32.totalorder %s17, 3
      %p61 = por %p59, %p60
      %p63 = scmp.ne.s32.totalorder %s48, %s62
      %p64 = scmp.eq.s32.totalorder %s17, 0
      %p65 = por %p63, %p64
      %s66 = ssub.s32 %s11, %s18
      %p67 = scmp.eq.s32.totalorder %s66, 0
      %s69 = sadd.s32 %s68, 1
      %s70 = scalar_select %p67, %s68, %s69
      %p73 = pneg %p67
      %p74 = scmp.eq.s32.totalorder %s11, 3
      %p75 = por %p73, %p74
      %p76 = scmp.ne.s32.totalorder %s68, %s71
      %p77 = scmp.eq.s32.totalorder %s11, 0
      %p78 = por %p76, %p77
      %p79 = scmp.ne.s32.totalorder %s68, %s71
      %p80 = scmp.eq.s32.totalorder %s16, 3
      %p81 = por %p79, %p80
      %p82 = scmp.ne.s32.totalorder %s71, %s72
      %p83 = scmp.eq.s32.totalorder %s16, 0
      %p84 = por %p82, %p83
      %p85 = scmp.ne.s32.totalorder %s71, %s72
      %p86 = scmp.eq.s32.totalorder %s17, 3
      %p87 = por %p85, %p86
      %p89 = scmp.ne.s32.totalorder %s72, %s88
      %p90 = scmp.eq.s32.totalorder %s17, 0
      %p91 = por %p89, %p90
      %p92 = scmp.le.s32.totalorder 1, %s11
      %p93 = scmp.lt.s32.totalorder %s11, 5
      %p94 = pnand %p92, %p93
      %p95 = pneg %p94
      // Predicated region
      $region9: #{_patchify_impl.1} parent=5 // pred_check
        _
      $region10: #{_patchify_impl.1} parent=5 // pred_check_branch
        %97 = sbr.rel (%p94) target = $region12
      $region11: #{_patchify_impl.1} parent=5 // pred_region
        %s98 = ssub.s32 %s11, 1
        // Predicated region
        $region13: #{_patchify_impl.1} parent=11 // pred_check
          %p99 = pneg %p58
        $region14: #{_patchify_impl.1} parent=11 // pred_check_branch
          %101 = sbr.rel (%p99) target = $region16
        $region15: #{_patchify_impl.1} parent=11 // pred_region
          _
        $region16: #{_patchify_impl.1} parent=11 // pred_fallthru
          _
      $region12: #{_patchify_impl.1} parent=5 // pred_fallthru
        _
      %p102 = scmp.lt.s32.totalorder %s11, 4
      // Predicated region
      $region17: #{_patchify_impl.1} parent=5 // pred_check
        %p103 = pneg %p102
      $region18: #{_patchify_impl.1} parent=5 // pred_check_branch
        %105 = sbr.rel (%p103) target = $region20
      $region19: #{_patchify_impl.1} parent=5 // pred_region
        // Predicated region
        $region21: #{_patchify_impl.1} parent=19 // pred_check
          %p106 = pneg %p31
        $region22: #{_patchify_impl.1} parent=19 // pred_check_branch
          %108 = sbr.rel (%p106) target = $region24
        $region23: #{_patchify_impl.1} parent=19 // pred_region
          %s109 = smul.u32 4, %s11
          %p110 = scmp.lt.s32.totalorder %s109, 15
          %s111 = scalar_select %p110, %s109, 15
          %s112 = smul.addr %s111, 8
          %s113 = smul.addr %s112, 8
          %s114 = scalar_lea.vmem %s0, %s113
          %s115 = smul.u32 4, %s11
        $region24: #{_patchify_impl.1} parent=19 // pred_fallthru
          _
      $region20: #{_patchify_impl.1} parent=5 // pred_fallthru
        _
      %p116 = scmp.le.s32.totalorder 1, %s11
      %p117 = scmp.lt.s32.totalorder %s11, 5
      %p118 = pnand %p116, %p117
      %p119 = pneg %p118
      // Predicated region
      $region25: #{_patchify_impl.1} parent=5 // pred_check
        _
      $region26: #{_patchify_impl.1} parent=5 // pred_check_branch
        %121 = sbr.rel (%p118) target = $region28
      $region27: #{_patchify_impl.1} parent=5 // pred_region
        %s122 = ssub.s32 %s11, 1
        %s123 = smul.u32 4, %s16
        %p124 = scmp.lt.s32.totalorder %s123, 15
        %s125 = scalar_select %p124, %s123, 15
        %s126 = smul.addr %s125, 8
        %s127 = smul.addr %s126, 8
        %s128 = scalar_lea.vmem %s0, %s127
        %p129 = pneg %p37
        %p130 = pneg %p34
        %p131 = pneg %p58
        %p132 = pneg %p55
        %p133 = pneg %p84
        %p134 = pneg %p81
        %s135 = sand.u32 %s71, 1
        %s136 = scalar_lea.sflag [#allocation3], %s135
        %s137 = sand.u32 %s71, 1
        %s138 = smul.addr %s137, 32
        %s139 = scalar_lea.vmem [#allocation2], %s138
        %s140 = smul.u32 4, %s16
        %p141 = scmp.lt.s32.totalorder %s140, 15
        %s142 = scalar_select %p141, %s140, 15
        %s143 = smul.addr %s142, 8
        %s144 = smul.addr %s143, 8
        %s145 = scalar_lea.vmem %s0, %s144
        %s146 = smul.u32 4, %s16
        %s147 = smul.u32 4, %s16
        %v148 = vld [vmem:[%s145] sm:$0xff]
        %v149 = vld [vmem:[%s145 + $0x40] sm:$0xff]
        %v150 = vld [vmem:[%s145 + $0x80] sm:$0xff]
        %v151 = vld [vmem:[%s145 + $0xc0] sm:$0xff]
        %v152 = vld [vmem:[%s1] sm:$0xff]
        %v153 = vld [vmem:[%s1 + $0x8] sm:$0xff]
        %v154 = vld [vmem:[%s1 + $0x10] sm:$0xff]
        %s155 = scalar_lea.vmem %s145, 8
        %v156 = vld [vmem:[%s155] sm:$0xff]
        %v157 = vld [vmem:[%s155 + $0x40] sm:$0xff]
        %v158 = vld [vmem:[%s155 + $0x80] sm:$0xff]
        %v159 = vld [vmem:[%s155 + $0xc0] sm:$0xff]
        %s160 = scalar_lea.vmem %s1, 24
        %v161 = vld [vmem:[%s160] sm:$0xff]
        %v162 = vld [vmem:[%s160 + $0x8] sm:$0xff]
        %v163 = vld [vmem:[%s160 + $0x10] sm:$0xff]
        %vm164 = vcmask 195584
        %v166 = vsel %vm164, %v156, 0
        %v169 = vsel %vm164, %v157, 0
        %v172 = vsel %vm164, %v158, 0
        %v175 = vsel %vm164, %v159, 0
        %177 = vmatpush.msra.mxu0 0.0
        %178 = vmatpush.msra.mxu0 0.0
        %179 = vmatpush.msra.mxu0 0.0
        %180 = vmatpush.msra.mxu0 0.0
        %181 = vmatpush.msra.mxu0 0.0
        %182 = vmatpush.msra.mxu0 0.0
        %183 = vmatpush.msra.mxu0 0.0
        %184 = vmatpush.msra.mxu0 0.0
        %185 = vmatpush.msra.mxu0 0.0
        %186 = vmatpush.msra.mxu0 0.0
        %187 = vmatpush.msra.mxu0 0.0
        %188 = vmatpush.msra.mxu0 0.0
        %189 = vmatpush.msra.mxu0 0.0
        %190 = vmatpush.msra.mxu0 %v163
        %191 = vmatpush.msra.mxu0 %v162
        %192 = vmatpush.msra.mxu0 %v161
        %193 = vmatmul.f32.gmra.mxu0 %v166
        %v194 = vpop.f32.mrf.mxu0
        %v195 = vadd.f32 0.0, %v194
        %196 = vmatmul.f32.gmra.mxu0 %v169
        %v197 = vpop.f32.mrf.mxu0
        %v198 = vadd.f32 0.0, %v197
        %199 = vmatmul.f32.gmra.mxu0 %v172
        %v200 = vpop.f32.mrf.mxu0
        %v201 = vadd.f32 0.0, %v200
        %202 = vmatmul.f32.gmra.mxu0 %v175
        %v203 = vpop.f32.mrf.mxu0
        %v204 = vadd.f32 0.0, %v203
        %205 = vdwg.mxu0
        %v207 = vsel %vm164, %v148, 0
        %v210 = vsel %vm164, %v149, 0
        %v213 = vsel %vm164, %v150, 0
        %v216 = vsel %vm164, %v151, 0
        %218 = vmatpush.msra.mxu0 0.0
        %219 = vmatpush.msra.mxu0 0.0
        %220 = vmatpush.msra.mxu0 0.0
        %221 = vmatpush.msra.mxu0 0.0
        %222 = vmatpush.msra.mxu0 0.0
        %223 = vmatpush.msra.mxu0 0.0
        %224 = vmatpush.msra.mxu0 0.0
        %225 = vmatpush.msra.mxu0 0.0
        %226 = vmatpush.msra.mxu0 0.0
        %227 = vmatpush.msra.mxu0 0.0
        %228 = vmatpush.msra.mxu0 0.0
        %229 = vmatpush.msra.mxu0 0.0
        %230 = vmatpush.msra.mxu0 0.0
        %231 = vmatpush.msra.mxu0 %v154
        %232 = vmatpush.msra.mxu0 %v153
        %233 = vmatpush.msra.mxu0 %v152
        %234 = vmatmul.f32.gmra.mxu0 %v207
        %v235 = vpop.f32.mrf.mxu0
        %v236 = vadd.f32 %v195, %v235
        %237 = vmatmul.f32.gmra.mxu0 %v210
        %v238 = vpop.f32.mrf.mxu0
        %v239 = vadd.f32 %v198, %v238
        %240 = vmatmul.f32.gmra.mxu0 %v213
        %v241 = vpop.f32.mrf.mxu0
        %v242 = vadd.f32 %v201, %v241
        %243 = vmatmul.f32.gmra.mxu0 %v216
        %v244 = vpop.f32.mrf.mxu0
        %v245 = vadd.f32 %v204, %v244
        %246 = vdwg.mxu0
        %s247 = scalar_lea.vmem %s145, 16
        %v248 = vld [vmem:[%s247] sm:$0xff]
        %v249 = vld [vmem:[%s247 + $0x40] sm:$0xff]
        %v250 = vld [vmem:[%s247 + $0x80] sm:$0xff]
        %v251 = vld [vmem:[%s247 + $0xc0] sm:$0xff]
        %s252 = scalar_lea.vmem %s1, 48
        %v253 = vld [vmem:[%s252] sm:$0xff]
        %v254 = vld [vmem:[%s252 + $0x8] sm:$0xff]
        %v255 = vld [vmem:[%s252 + $0x10] sm:$0xff]
        %v257 = vsel %vm164, %v248, 0
        %v260 = vsel %vm164, %v249, 0
        %v263 = vsel %vm164, %v250, 0
        %v266 = vsel %vm164, %v251, 0
        %268 = vmatpush.msra.mxu0 0.0
        %269 = vmatpush.msra.mxu0 0.0
        %270 = vmatpush.msra.mxu0 0.0
        %271 = vmatpush.msra.mxu0 0.0
        %272 = vmatpush.msra.mxu0 0.0
        %273 = vmatpush.msra.mxu0 0.0
        %274 = vmatpush.msra.mxu0 0.0
        %275 = vmatpush.msra.mxu0 0.0
        %276 = vmatpush.msra.mxu0 0.0
        %277 = vmatpush.msra.mxu0 0.0
        %278 = vmatpush.msra.mxu0 0.0
        %279 = vmatpush.msra.mxu0 0.0
        %280 = vmatpush.msra.mxu0 0.0
        %281 = vmatpush.msra.mxu0 %v255
        %282 = vmatpush.msra.mxu0 %v254
        %283 = vmatpush.msra.mxu0 %v253
        %284 = vmatmul.f32.gmra.mxu0 %v257
        %v285 = vpop.f32.mrf.mxu0
        %v286 = vadd.f32 0.0, %v285
        %287 = vmatmul.f32.gmra.mxu0 %v260
        %v288 = vpop.f32.mrf.mxu0
        %v289 = vadd.f32 0.0, %v288
        %290 = vmatmul.f32.gmra.mxu0 %v263
        %v291 = vpop.f32.mrf.mxu0
        %v292 = vadd.f32 0.0, %v291
        %293 = vmatmul.f32.gmra.mxu0 %v266
        %v294 = vpop.f32.mrf.mxu0
        %v295 = vadd.f32 0.0, %v294
        %296 = vdwg.mxu0
        %v297 = vadd.f32 %v236, %v286
        %v298 = vadd.f32 %v239, %v289
        %v299 = vadd.f32 %v242, %v292
        %v300 = vadd.f32 %v245, %v295
        %s301 = scalar_lea.vmem %s145, 24
        %v302 = vld [vmem:[%s301] sm:$0xff]
        %v303 = vld [vmem:[%s301 + $0x40] sm:$0xff]
        %v304 = vld [vmem:[%s301 + $0x80] sm:$0xff]
        %v305 = vld [vmem:[%s301 + $0xc0] sm:$0xff]
        %s306 = scalar_lea.vmem %s1, 72
        %v307 = vld [vmem:[%s306] sm:$0xff]
        %v308 = vld [vmem:[%s306 + $0x8] sm:$0xff]
        %v309 = vld [vmem:[%s306 + $0x10] sm:$0xff]
        %v311 = vsel %vm164, %v302, 0
        %v314 = vsel %vm164, %v303, 0
        %v317 = vsel %vm164, %v304, 0
        %v320 = vsel %vm164, %v305, 0
        %322 = vmatpush.msra.mxu0 0.0
        %323 = vmatpush.msra.mxu0 0.0
        %324 = vmatpush.msra.mxu0 0.0
        %325 = vmatpush.msra.mxu0 0.0
        %326 = vmatpush.msra.mxu0 0.0
        %327 = vmatpush.msra.mxu0 0.0
        %328 = vmatpush.msra.mxu0 0.0
        %329 = vmatpush.msra.mxu0 0.0
        %330 = vmatpush.msra.mxu0 0.0
        %331 = vmatpush.msra.mxu0 0.0
        %332 = vmatpush.msra.mxu0 0.0
        %333 = vmatpush.msra.mxu0 0.0
        %334 = vmatpush.msra.mxu0 0.0
        %335 = vmatpush.msra.mxu0 %v309
        %336 = vmatpush.msra.mxu0 %v308
        %337 = vmatpush.msra.mxu0 %v307
        %338 = vmatmul.f32.gmra.mxu0 %v311
        %v339 = vpop.f32.mrf.mxu0
        %v340 = vadd.f32 0.0, %v339
        %341 = vmatmul.f32.gmra.mxu0 %v314
        %v342 = vpop.f32.mrf.mxu0
        %v343 = vadd.f32 0.0, %v342
        %344 = vmatmul.f32.gmra.mxu0 %v317
        %v345 = vpop.f32.mrf.mxu0
        %v346 = vadd.f32 0.0, %v345
        %347 = vmatmul.f32.gmra.mxu0 %v320
        %v348 = vpop.f32.mrf.mxu0
        %v349 = vadd.f32 0.0, %v348
        %350 = vdwg.mxu0
        %v351 = vadd.f32 %v297, %v340
        %v352 = vadd.f32 %v298, %v343
        %v353 = vadd.f32 %v299, %v346
        %v354 = vadd.f32 %v300, %v349
        %s355 = scalar_lea.vmem %s145, 32
        %v356 = vld [vmem:[%s355] sm:$0xff]
        %v357 = vld [vmem:[%s355 + $0x40] sm:$0xff]
        %v358 = vld [vmem:[%s355 + $0x80] sm:$0xff]
        %v359 = vld [vmem:[%s355 + $0xc0] sm:$0xff]
        %s360 = scalar_lea.vmem %s1, 96
        %v361 = vld [vmem:[%s360] sm:$0xff]
        %v362 = vld [vmem:[%s360 + $0x8] sm:$0xff]
        %v363 = vld [vmem:[%s360 + $0x10] sm:$0xff]
        %v365 = vsel %vm164, %v356, 0
        %v368 = vsel %vm164, %v357, 0
        %v371 = vsel %vm164, %v358, 0
        %v374 = vsel %vm164, %v359, 0
        %376 = vmatpush.msra.mxu0 0.0
        %377 = vmatpush.msra.mxu0 0.0
        %378 = vmatpush.msra.mxu0 0.0
        %379 = vmatpush.msra.mxu0 0.0
        %380 = vmatpush.msra.mxu0 0.0
        %381 = vmatpush.msra.mxu0 0.0
        %382 = vmatpush.msra.mxu0 0.0
        %383 = vmatpush.msra.mxu0 0.0
        %384 = vmatpush.msra.mxu0 0.0
        %385 = vmatpush.msra.mxu0 0.0
        %386 = vmatpush.msra.mxu0 0.0
        %387 = vmatpush.msra.mxu0 0.0
        %388 = vmatpush.msra.mxu0 0.0
        %389 = vmatpush.msra.mxu0 %v363
        %390 = vmatpush.msra.mxu0 %v362
        %391 = vmatpush.msra.mxu0 %v361
        %392 = vmatmul.f32.gmra.mxu0 %v365
        %v393 = vpop.f32.mrf.mxu0
        %v394 = vadd.f32 0.0, %v393
        %395 = vmatmul.f32.gmra.mxu0 %v368
        %v396 = vpop.f32.mrf.mxu0
        %v397 = vadd.f32 0.0, %v396
        %398 = vmatmul.f32.gmra.mxu0 %v371
        %v399 = vpop.f32.mrf.mxu0
        %v400 = vadd.f32 0.0, %v399
        %401 = vmatmul.f32.gmra.mxu0 %v374
        %v402 = vpop.f32.mrf.mxu0
        %v403 = vadd.f32 0.0, %v402
        %404 = vdwg.mxu0
        %v405 = vadd.f32 %v351, %v394
        %v406 = vadd.f32 %v352, %v397
        %v407 = vadd.f32 %v353, %v400
        %v408 = vadd.f32 %v354, %v403
        %s409 = scalar_lea.vmem %s145, 40
        %v410 = vld [vmem:[%s409] sm:$0xff]
        %v411 = vld [vmem:[%s409 + $0x40] sm:$0xff]
        %v412 = vld [vmem:[%s409 + $0x80] sm:$0xff]
        %v413 = vld [vmem:[%s409 + $0xc0] sm:$0xff]
        %s414 = scalar_lea.vmem %s1, 120
        %v415 = vld [vmem:[%s414] sm:$0xff]
        %v416 = vld [vmem:[%s414 + $0x8] sm:$0xff]
        %v417 = vld [vmem:[%s414 + $0x10] sm:$0xff]
        %v419 = vsel %vm164, %v410, 0
        %v422 = vsel %vm164, %v411, 0
        %v425 = vsel %vm164, %v412, 0
        %v428 = vsel %vm164, %v413, 0
        %430 = vmatpush.msra.mxu0 0.0
        %431 = vmatpush.msra.mxu0 0.0
        %432 = vmatpush.msra.mxu0 0.0
        %433 = vmatpush.msra.mxu0 0.0
        %434 = vmatpush.msra.mxu0 0.0
        %435 = vmatpush.msra.mxu0 0.0
        %436 = vmatpush.msra.mxu0 0.0
        %437 = vmatpush.msra.mxu0 0.0
        %438 = vmatpush.msra.mxu0 0.0
        %439 = vmatpush.msra.mxu0 0.0
        %440 = vmatpush.msra.mxu0 0.0
        %441 = vmatpush.msra.mxu0 0.0
        %442 = vmatpush.msra.mxu0 0.0
        %443 = vmatpush.msra.mxu0 %v417
        %444 = vmatpush.msra.mxu0 %v416
        %445 = vmatpush.msra.mxu0 %v415
        %446 = vmatmul.f32.gmra.mxu0 %v419
        %v447 = vpop.f32.mrf.mxu0
        %v448 = vadd.f32 0.0, %v447
        %449 = vmatmul.f32.gmra.mxu0 %v422
        %v450 = vpop.f32.mrf.mxu0
        %v451 = vadd.f32 0.0, %v450
        %452 = vmatmul.f32.gmra.mxu0 %v425
        %v453 = vpop.f32.mrf.mxu0
        %v454 = vadd.f32 0.0, %v453
        %455 = vmatmul.f32.gmra.mxu0 %v428
        %v456 = vpop.f32.mrf.mxu0
        %v457 = vadd.f32 0.0, %v456
        %458 = vdwg.mxu0
        %v459 = vadd.f32 %v405, %v448
        %v460 = vadd.f32 %v406, %v451
        %v461 = vadd.f32 %v407, %v454
        %v462 = vadd.f32 %v408, %v457
        %s463 = scalar_lea.vmem %s145, 48
        %v464 = vld [vmem:[%s463] sm:$0xff]
        %v465 = vld [vmem:[%s463 + $0x40] sm:$0xff]
        %v466 = vld [vmem:[%s463 + $0x80] sm:$0xff]
        %v467 = vld [vmem:[%s463 + $0xc0] sm:$0xff]
        %s468 = scalar_lea.vmem %s1, 144
        %v469 = vld [vmem:[%s468] sm:$0xff]
        %v470 = vld [vmem:[%s468 + $0x8] sm:$0xff]
        %v471 = vld [vmem:[%s468 + $0x10] sm:$0xff]
        %v473 = vsel %vm164, %v464, 0
        %v476 = vsel %vm164, %v465, 0
        %v479 = vsel %vm164, %v466, 0
        %v482 = vsel %vm164, %v467, 0
        %484 = vmatpush.msra.mxu0 0.0
        %485 = vmatpush.msra.mxu0 0.0
        %486 = vmatpush.msra.mxu0 0.0
        %487 = vmatpush.msra.mxu0 0.0
        %488 = vmatpush.msra.mxu0 0.0
        %489 = vmatpush.msra.mxu0 0.0
        %490 = vmatpush.msra.mxu0 0.0
        %491 = vmatpush.msra.mxu0 0.0
        %492 = vmatpush.msra.mxu0 0.0
        %493 = vmatpush.msra.mxu0 0.0
        %494 = vmatpush.msra.mxu0 0.0
        %495 = vmatpush.msra.mxu0 0.0
        %496 = vmatpush.msra.mxu0 0.0
        %497 = vmatpush.msra.mxu0 %v471
        %498 = vmatpush.msra.mxu0 %v470
        %499 = vmatpush.msra.mxu0 %v469
        %500 = vmatmul.f32.gmra.mxu0 %v473
        %v501 = vpop.f32.mrf.mxu0
        %v502 = vadd.f32 0.0, %v501
        %503 = vmatmul.f32.gmra.mxu0 %v476
        %v504 = vpop.f32.mrf.mxu0
        %v505 = vadd.f32 0.0, %v504
        %506 = vmatmul.f32.gmra.mxu0 %v479
        %v507 = vpop.f32.mrf.mxu0
        %v508 = vadd.f32 0.0, %v507
        %509 = vmatmul.f32.gmra.mxu0 %v482
        %v510 = vpop.f32.mrf.mxu0
        %v511 = vadd.f32 0.0, %v510
        %512 = vdwg.mxu0
        %v513 = vadd.f32 %v459, %v502
        %v514 = vadd.f32 %v460, %v505
        %v515 = vadd.f32 %v461, %v508
        %v516 = vadd.f32 %v462, %v511
        %s517 = scalar_lea.vmem %s145, 56
        %v518 = vld [vmem:[%s517] sm:$0xff]
        %v519 = vld [vmem:[%s517 + $0x40] sm:$0xff]
        %v520 = vld [vmem:[%s517 + $0x80] sm:$0xff]
        %v521 = vld [vmem:[%s517 + $0xc0] sm:$0xff]
        %s522 = scalar_lea.vmem %s1, 168
        %v523 = vld [vmem:[%s522] sm:$0xff]
        %v524 = vld [vmem:[%s522 + $0x8] sm:$0xff]
        %v525 = vld [vmem:[%s522 + $0x10] sm:$0xff]
        %v527 = vsel %vm164, %v518, 0
        %v530 = vsel %vm164, %v519, 0
        %v533 = vsel %vm164, %v520, 0
        %v536 = vsel %vm164, %v521, 0
        %538 = vmatpush.msra.mxu0 0.0
        %539 = vmatpush.msra.mxu0 0.0
        %540 = vmatpush.msra.mxu0 0.0
        %541 = vmatpush.msra.mxu0 0.0
        %542 = vmatpush.msra.mxu0 0.0
        %543 = vmatpush.msra.mxu0 0.0
        %544 = vmatpush.msra.mxu0 0.0
        %545 = vmatpush.msra.mxu0 0.0
        %546 = vmatpush.msra.mxu0 0.0
        %547 = vmatpush.msra.mxu0 0.0
        %548 = vmatpush.msra.mxu0 0.0
        %549 = vmatpush.msra.mxu0 0.0
        %550 = vmatpush.msra.mxu0 0.0
        %551 = vmatpush.msra.mxu0 %v525
        %552 = vmatpush.msra.mxu0 %v524
        %553 = vmatpush.msra.mxu0 %v523
        %554 = vmatmul.f32.gmra.mxu0 %v527
        %v555 = vpop.f32.mrf.mxu0
        %v556 = vadd.f32 0.0, %v555
        %557 = vmatmul.f32.gmra.mxu0 %v530
        %v558 = vpop.f32.mrf.mxu0
        %v559 = vadd.f32 0.0, %v558
        %560 = vmatmul.f32.gmra.mxu0 %v533
        %v561 = vpop.f32.mrf.mxu0
        %v562 = vadd.f32 0.0, %v561
        %563 = vmatmul.f32.gmra.mxu0 %v536
        %v564 = vpop.f32.mrf.mxu0
        %v565 = vadd.f32 0.0, %v564
        %566 = vdwg.mxu0
        %v567 = vadd.f32 %v513, %v556
        %v568 = vadd.f32 %v514, %v559
        %v569 = vadd.f32 %v515, %v562
        %v570 = vadd.f32 %v516, %v565
        %571 = vst [vmem:[%s139] sm:$0xff] %v567
        %572 = vst [vmem:[%s139 + $0x8] sm:$0xff] %v568
        %573 = vst [vmem:[%s139 + $0x10] sm:$0xff] %v569
        %574 = vst [vmem:[%s139 + $0x18] sm:$0xff] %v570
        %s575 = sand.u32 %s71, 1
        %s576 = scalar_lea.sflag [#allocation3], %s575
        %s577 = sand.u32 %s71, 1
        %s578 = smul.addr %s577, 32
        %s579 = scalar_lea.vmem [#allocation2], %s578
        // Predicated region
        $region29: #{_patchify_impl.1} parent=27 // pred_check
          %p580 = pneg %p81
        $region30: #{_patchify_impl.1} parent=27 // pred_check_branch
          %582 = sbr.rel (%p580) target = $region32
        $region31: #{_patchify_impl.1} parent=27 // pred_region
          %s583 = smul.u32 4, %s16
          %585 = vsyncadd %s576, 0
          %s586 = smul.addr %s583, 8
          %s587 = scalar_lea.hbm %s2, %s586
          %s588 = sshll.u32 %s579, 4
          %s589 = int_to_ptr.vmem [resolvable:$true] %s588
          %s590 = sshll.u32 %s587, 4
          %s591 = int_to_ptr.hbm [resolvable:$true] %s590
          %596 = dma.vmem_to_hbm [thread:$0]  %s589, 512, %s591, %s576, 128, 128, 8
        $region32: #{_patchify_impl.1} parent=27 // pred_fallthru
          _
      $region28: #{_patchify_impl.1} parent=5 // pred_fallthru
        _
      %p597 = scmp.le.s32.totalorder 2, %s11
      // Predicated region
      $region33: #{_patchify_impl.1} parent=5 // pred_check
        %p598 = pneg %p597
      $region34: #{_patchify_impl.1} parent=5 // pred_check_branch
        %600 = sbr.rel (%p598) target = $region36
      $region35: #{_patchify_impl.1} parent=5 // pred_region
        %s601 = ssub.s32 %s11, 2
        // Predicated region
        $region37: #{_patchify_impl.1} parent=35 // pred_check
          %p602 = pneg %p87
        $region38: #{_patchify_impl.1} parent=35 // pred_check_branch
          %604 = sbr.rel (%p602) target = $region40
        $region39: #{_patchify_impl.1} parent=35 // pred_region
          %s605 = sand.u32 %s72, 1
          %s606 = scalar_lea.sflag [#allocation3], %s605
          %s607 = sand.u32 %s72, 1
          %s608 = smul.addr %s607, 32
          %s609 = scalar_lea.vmem [#allocation2], %s608
          %611 = dma.done %s606, 512
        $region40: #{_patchify_impl.1} parent=35 // pred_fallthru
          _
      $region36: #{_patchify_impl.1} parent=5 // pred_fallthru
        _
    $region6: #{_patchify_impl.1} parent=1 // loop_footer
      %s15 = sadd.s32 1, %s11
    $region7: #{_patchify_impl.1} parent=1 // loop_footer_branch
      %10 = sbr.rel target = $region3
    $region8: #{_patchify_impl.1} parent=1 // loop_exit
      _
    %612 = vsyncpa [#allocation3], 1
    %s613 = scalar_lea.sflag [#allocation3], 1
    %614 = vsyncpa %s613, 1

</llo_original>
